<compile_context>
chip_gen: v7x
topology: tpu7x:2x2x1
jax: 0.10.0
libtpu: 0.0.40
codegen_flags: <defaults>
</compile_context>

<pallas_src>
import numpy as np

import jax
import jax.numpy as jnp
from jax.experimental import pallas as pl
from jax.experimental.pallas import tpu as pltpu

N_QUBITS = 4
N_LAYERS = 3
HIDDEN = 60
LANE = 128
DIM = 2 ** N_QUBITS              # 16 amplitudes
QC_ROWS = 2 * LANE + 8           # packed quantum constants: [V^T | Zsign2 | qbits(+pad)]


def _round_up(x, m):
    return ((x + m - 1) // m) * m


# ---------------------------------------------------------------------------
# Pallas kernel: fused MLP + fixed quantum circuit
# ---------------------------------------------------------------------------
def _quantumnet_kernel(x_ref, w1_ref, w23_ref, b_ref, qc_ref, o_ref):
    # ----- classical MLP: 3x (Linear + ReLU), outputs lane-padded to 128 -----
    w2 = w23_ref[0]                                   # (128, 128) bf16
    w3 = w23_ref[1]                                   # (128, 128) bf16
    h = jnp.dot(x_ref[...], w1_ref[...], preferred_element_type=jnp.float32)
    h = jnp.maximum(h + b_ref[0:1, :], 0.0)
    h = jnp.dot(h.astype(w2.dtype), w2, preferred_element_type=jnp.float32)
    h = jnp.maximum(h + b_ref[1:2, :], 0.0)
    h = jnp.dot(h.astype(w3.dtype), w3, preferred_element_type=jnp.float32)
    angles = jnp.maximum(h + b_ref[2:3, :], 0.0)      # (tb, 128); cols >= 4 are exactly 0

    # ----- fixed quantum circuit as two lane-dense real matmuls -----
    # Product-state magnitudes after AngleEmbedding (VPU broadcasts only).
    half = 0.5 * angles
    c = jnp.cos(half)
    s = jnp.sin(half)
    qb = qc_ref[2 * LANE:2 * LANE + N_QUBITS, :]      # (4, 128) bit pattern ({0,1}; cols>=16 zero)
    m = None
    for q in range(N_QUBITS):
        cq = c[:, q:q + 1]                            # (tb, 1)
        sq = s[:, q:q + 1]                            # (tb, 1)
        bq = qb[q:q + 1, :]                           # (1, 128)
        factor = cq + (sq - cq) * bq                  # (tb, 128)
        m = factor if m is None else m * factor

    vt = qc_ref[0:LANE, :]                            # (128,128): [Re V^T | Im V^T] in cols 0:32
    zs = qc_ref[LANE:2 * LANE, :]                     # (128,128): doubled Z-sign matrix (cols 0:4)
    psi = jnp.dot(m, vt, preferred_element_type=jnp.float32)       # (tb,128) Re|Im packed
    probs = psi * psi
    out = jnp.dot(probs, zs, preferred_element_type=jnp.float32)   # (tb,128); cols >= 4 zero
    o_ref[...] = out.astype(o_ref.dtype)              # unmasked lane-dense store


# ---------------------------------------------------------------------------
# One-time constant preparation (hoisted out of the per-call path)
# ---------------------------------------------------------------------------
def _quantum_consts_packed(qweights):
    """Fold the angle-independent circuit into packed real matrices (host-side numpy).

    After AngleEmbedding the state is psi0[b] = (-i)^popcount(b) * m[b] with m real,
    BasicEntanglerLayers is a fixed unitary U, so psi = (U * phase) @ m = V @ m and
    <Z_q> = |psi|^2 @ sign[:, q].  Qubit 0 is the most-significant basis bit.
    """
    n, dim = N_QUBITS, DIM
    qw = np.asarray(qweights, dtype=np.float64)

    def rx(theta):
        c, s = np.cos(theta / 2.0), np.sin(theta / 2.0)
        return np.array([[c, -1j * s], [-1j * s, c]], dtype=np.complex128)

    def cnot(control, target):
        idx = np.arange(dim)
        cbit = (idx >> (n - 1 - control)) & 1
        flipped = idx ^ (cbit << (n - 1 - target))
        mat = np.zeros((dim, dim), dtype=np.complex128)
        mat[flipped, idx] = 1.0                       # M[i, j] = delta(i, flip(j))
        return mat

    ring = np.eye(dim, dtype=np.complex128)
    for q in range(n):
        ring = cnot(q, (q + 1) % n) @ ring
    u = np.eye(dim, dtype=np.complex128)
    for l in range(N_LAYERS):
        r = rx(qw[l, 0])
        for q in range(1, n):
            r = np.kron(r, rx(qw[l, q]))
        u = ring @ (r @ u)

    phase = np.array([(-1j) ** bin(b).count("1") for b in range(dim)], dtype=np.complex128)
    vt = (u * phase[None, :]).T                       # (16,16); batched psi = m @ vt

    qbits = np.array([[(b >> (n - 1 - q)) & 1 for b in range(dim)] for q in range(n)],
                     dtype=np.float32)                # (4,16), qubit 0 = MSB
    sign = 1.0 - 2.0 * qbits.T                        # (16,4)

    qc = np.zeros((QC_ROWS, LANE), dtype=np.float32)
    qc[0:dim, 0:dim] = np.real(vt)                    # psi_r lands in cols 0:16
    qc[0:dim, dim:2 * dim] = np.imag(vt)              # psi_i lands in cols 16:32
    qc[LANE:LANE + dim, 0:n] = sign                   # |psi_r|^2 contribution
    qc[LANE + dim:LANE + 2 * dim, 0:n] = sign         # |psi_i|^2 contribution
    qc[2 * LANE:2 * LANE + n, 0:dim] = qbits          # embedding bit pattern
    return qc


def prepare_quantumnet_params(params, qweights, *, mxu_dtype=jnp.bfloat16):
    """Pad/stack weights and precompute quantum constants ONCE; returns device arrays."""
    w1, b1, w2, b2, w3, b3 = (np.asarray(a, dtype=np.float32) for a in params)
    d_in = w1.shape[0]

    w1p = np.zeros((d_in, LANE), np.float32)
    w1p[:, :HIDDEN] = w1
    w23p = np.zeros((2, LANE, LANE), np.float32)
    w23p[0, :HIDDEN, :HIDDEN] = w2
    w23p[1, :HIDDEN, :N_QUBITS] = w3
    biases = np.zeros((3, LANE), np.float32)          # padded bias cols are 0 -> ReLU keeps pads 0
    biases[0, :HIDDEN] = b1.reshape(-1)
    biases[1, :HIDDEN] = b2.reshape(-1)
    biases[2, :N_QUBITS] = b3.reshape(-1)

    qc = _quantum_consts_packed(qweights)
    return (jnp.asarray(w1p),                         # f32 (K=32 layer is tiny)
            jnp.asarray(w23p, dtype=mxu_dtype),       # bf16: MXU-native, half the bytes
            jnp.asarray(biases),
            jnp.asarray(qc))


def _tensorcores_per_chip():
    try:
        d = jax.devices()[0]
        kind = str(getattr(d, "device_kind", "")).lower()
        if "v7" in kind:
            return 2
        nc = getattr(d, "num_cores", None)
        if isinstance(nc, int) and 1 <= nc <= 8:
            return nc
    except Exception:
        pass
    return 1


# ---------------------------------------------------------------------------
# Forward pass (jit this; all constant prep has already been done)
# ---------------------------------------------------------------------------
def _const_spec(a):
    return pl.BlockSpec(a.shape, lambda i, nd=a.ndim: (0,) * nd)


def quantumnet_forward(x, prepared, *, num_cores=1, tb_max=4096):
    w1p, w23p, biases, qc = prepared
    B, d_in = x.shape

    # Batch tiling: one big tile (no grid) on single-TC parts; exactly 2 balanced
    # tiles on 2-TC parts (v7x). tb_max keeps live activations well under VMEM.
    b8 = _round_up(B, 8)
    if num_cores >= 2 and b8 >= 16:
        tb = min(_round_up(-(-b8 // 2), 8), tb_max)
    else:
        tb = min(b8, tb_max)
    b_pad = _round_up(b8, tb)
    num_tiles = b_pad // tb

    x_pad = x if b_pad == B else jnp.pad(x, ((0, b_pad - B), (0, 0)))
    consts = (w1p, w23p, biases, qc)
    out_shape = jax.ShapeDtypeStruct((b_pad, LANE), jnp.float32)

    if num_tiles == 1:
        # Single batch tile: drop the grid entirely (one untiled invocation).
        out = pl.pallas_call(_quantumnet_kernel, out_shape=out_shape)(x_pad, *consts)
    else:
        # Constant index_maps keep weight/constant blocks resident across grid
        # steps; batch axis is "parallel" so 2 tiles use both v7x TensorCores.
        out = pl.pallas_call(
            _quantumnet_kernel,
            out_shape=out_shape,
            grid=(num_tiles,),
            in_specs=[pl.BlockSpec((tb, d_in), lambda i: (i, 0))]
            + [_const_spec(a) for a in consts],
            out_specs=pl.BlockSpec((tb, LANE), lambda i: (i, 0)),
            compiler_params=pltpu.CompilerParams(
                dimension_semantics=("parallel",)),
        )(x_pad, *consts)

    return out[:B, :N_QUBITS]


# ---------------------------------------------------------------------------
# Independent reference (exact statevector simulation) for validation only.
# ---------------------------------------------------------------------------
_CNOT = jnp.array(
    [[1, 0, 0, 0], [0, 1, 0, 0], [0, 0, 0, 1], [0, 0, 1, 0]], dtype=jnp.complex64
)


def _rx(theta):
    c = jnp.cos(theta / 2.0).astype(jnp.complex64)
    s = jnp.sin(theta / 2.0).astype(jnp.complex64)
    return jnp.array([[c, -1j * s], [-1j * s, c]], dtype=jnp.complex64)


def _apply_1q(state, gate, wire):
    state = jnp.moveaxis(state, wire, 0)
    state = jnp.tensordot(gate, state, axes=([1], [0]))
    return jnp.moveaxis(state, 0, wire)


def _apply_cnot(state, control, target):
    perm = jnp.moveaxis(state, (control, target), (0, 1))
    shp = perm.shape
    flat = perm.reshape(4, -1)
    flat = _CNOT @ flat
    perm = flat.reshape(shp)
    return jnp.moveaxis(perm, (0, 1), (control, target))


def _qnode_single(angles, weights):
    n = N_QUBITS
    state = jnp.zeros((2,) * n, dtype=jnp.complex64).at[(0,) * n].set(1.0)
    for q in range(n):
        state = _apply_1q(state, _rx(angles[q]), q)
    for l in range(N_LAYERS):
        for q in range(n):
            state = _apply_1q(state, _rx(weights[l, q]), q)
        for q in range(n):
            state = _apply_cnot(state, q, (q + 1) % n)
    probs = jnp.abs(state) ** 2
    z_eig = jnp.array([1.0, -1.0], dtype=jnp.float32)
    expvals = []
    for q in range(n):
        axes = tuple(a for a in range(n) if a != q)
        pq = probs.sum(axis=axes).astype(jnp.float32)
        expvals.append(jnp.sum(pq * z_eig))
    return jnp.stack(expvals)


def _reference_forward(x, params, qweights):
    w1, b1, w2, b2, w3, b3 = params
    hi = jax.lax.Precision.HIGHEST
    h = jnp.maximum(jnp.dot(x, w1, precision=hi) + b1, 0.0)
    h = jnp.maximum(jnp.dot(h, w2, precision=hi) + b2, 0.0)
    a = jnp.maximum(jnp.dot(h, w3, precision=hi) + b3, 0.0)
    return jax.vmap(_qnode_single, in_axes=(0, None))(a, qweights)


# ---------------------------------------------------------------------------
if __name__ == "__main__":
    key = jax.random.PRNGKey(0)
    keys = jax.random.split(key, 9)
    B, D = 8, 32  # input_shape = (batch, 32)

    x = jax.random.normal(keys[0], (B, D), dtype=jnp.float32)

    def linear_init(kw, kb, fan_in, fan_out):
        # matches torch.nn.Linear default: U(-1/sqrt(fan_in), 1/sqrt(fan_in))
        bound = 1.0 / (fan_in ** 0.5)
        w = jax.random.uniform(kw, (fan_in, fan_out), jnp.float32, -bound, bound)
        b = jax.random.uniform(kb, (1, fan_out), jnp.float32, -bound, bound)
        return w, b

    w1, b1 = linear_init(keys[1], keys[2], D, HIDDEN)
    w2, b2 = linear_init(keys[3], keys[4], HIDDEN, HIDDEN)
    w3, b3 = linear_init(keys[5], keys[6], HIDDEN, N_QUBITS)
    # TorchLayer default init for BasicEntanglerLayers weights: U(0, 2*pi)
    qweights = jax.random.uniform(
        keys[7], (N_LAYERS, N_QUBITS), jnp.float32, 0.0, 2.0 * jnp.pi
    )
    params = (w1, b1, w2, b2, w3, b3)

    # One-time constant prep, hoisted out of the per-call path.
    prepared = prepare_quantumnet_params(params, qweights)
    n_cores = _tensorcores_per_chip()

    fwd = jax.jit(quantumnet_forward, static_argnames=("num_cores", "tb_max"))

    # Small batch: single tile -> no-grid path.
    out = jax.block_until_ready(fwd(x, prepared, num_cores=n_cores))
    assert out.shape == (B, N_QUBITS) and out.dtype == jnp.float32
    ref = _reference_forward(x, params, qweights)
    assert float(jnp.max(jnp.abs(out - ref))) < 5e-2

    # Larger batch: one big tile on 1-TC parts, 2 balanced tiles on v7x.
    B2 = 512
    x2 = jax.random.normal(keys[8], (B2, D), dtype=jnp.float32)
    out2 = jax.block_until_ready(fwd(x2, prepared, num_cores=n_cores))
    assert out2.shape == (B2, N_QUBITS)
    ref2 = _reference_forward(x2, params, qweights)
    assert float(jnp.max(jnp.abs(out2 - ref2))) < 5e-2

    # Explicitly exercise the 2-tile "parallel" grid path regardless of device.
    out3 = jax.block_until_ready(fwd(x2, prepared, num_cores=2))
    assert float(jnp.max(jnp.abs(out3 - ref2))) < 5e-2

    print("KERNEL_OK")
</pallas_src>

<mosaic_0001>
module attributes {stable_mosaic.version = 11 : i64} {
  func.func @_quantumnet_kernel(%arg0: memref<8x32xf32, #tpu.memory_space<vmem>>, %arg1: memref<32x128xf32, #tpu.memory_space<vmem>>, %arg2: memref<2x128x128xbf16, #tpu.memory_space<vmem>>, %arg3: memref<3x128xf32, #tpu.memory_space<vmem>>, %arg4: memref<264x128xf32, #tpu.memory_space<vmem>>, %arg5: memref<8x128xf32, #tpu.memory_space<vmem>>) attributes {dimension_semantics = [], scalar_prefetch = 0 : i64, scratch_operands = 0 : i64, tpu.core_type = #tpu.core_type<tc>} {
    %c0 = arith.constant 0 : index
    %c0_0 = arith.constant 0 : index
    %c0_1 = arith.constant 0 : index
    %0 = vector.load %arg2[%c0, %c0_0, %c0_1] : memref<2x128x128xbf16, #tpu.memory_space<vmem>>, vector<1x128x128xbf16>
    %1 = vector.shape_cast %0 : vector<1x128x128xbf16> to vector<128x128xbf16>
    %c1 = arith.constant 1 : index
    %c0_2 = arith.constant 0 : index
    %c0_3 = arith.constant 0 : index
    %2 = vector.load %arg2[%c1, %c0_2, %c0_3] : memref<2x128x128xbf16, #tpu.memory_space<vmem>>, vector<1x128x128xbf16>
    %3 = vector.shape_cast %2 : vector<1x128x128xbf16> to vector<128x128xbf16>
    %c0_4 = arith.constant 0 : index
    %c0_5 = arith.constant 0 : index
    %4 = vector.load %arg0[%c0_4, %c0_5] : memref<8x32xf32, #tpu.memory_space<vmem>>, vector<8x32xf32>
    %c0_6 = arith.constant 0 : index
    %c0_7 = arith.constant 0 : index
    %5 = vector.load %arg1[%c0_6, %c0_7] : memref<32x128xf32, #tpu.memory_space<vmem>>, vector<32x128xf32>
    %cst = arith.constant dense<0.000000e+00> : vector<8x128xf32>
    %6 = tpu.matmul %4, %5, %cst {dimension_numbers = #tpu.dot_dimension_numbers<[1], [0], [0], [1], [0, 0, 1, 1], [], []>} : vector<8x32xf32>, vector<32x128xf32>, vector<8x128xf32> -> vector<8x128xf32>
    %c0_8 = arith.constant 0 : index
    %c0_9 = arith.constant 0 : index
    %7 = vector.load %arg3[%c0_8, %c0_9] : memref<3x128xf32, #tpu.memory_space<vmem>>, vector<1x128xf32>
    %8 = vector.broadcast %7 : vector<1x128xf32> to vector<8x128xf32>
    %9 = arith.addf %6, %8 : vector<8x128xf32>
    %cst_10 = arith.constant 0.000000e+00 : f32
    %10 = vector.broadcast %cst_10 : f32 to vector<8x128xf32>
    %11 = arith.maximumf %9, %10 : vector<8x128xf32>
    %12 = arith.truncf %11 : vector<8x128xf32> to vector<8x128xbf16>
    %cst_11 = arith.constant dense<0.000000e+00> : vector<8x128xf32>
    %13 = tpu.matmul %12, %1, %cst_11 {dimension_numbers = #tpu.dot_dimension_numbers<[1], [0], [0], [1], [0, 0, 1, 1], [], []>} : vector<8x128xbf16>, vector<128x128xbf16>, vector<8x128xf32> -> vector<8x128xf32>
    %c1_12 = arith.constant 1 : index
    %c0_13 = arith.constant 0 : index
    %14 = vector.load %arg3[%c1_12, %c0_13] : memref<3x128xf32, #tpu.memory_space<vmem>>, vector<1x128xf32>
    %15 = vector.broadcast %14 : vector<1x128xf32> to vector<8x128xf32>
    %16 = arith.addf %13, %15 : vector<8x128xf32>
    %cst_14 = arith.constant 0.000000e+00 : f32
    %17 = vector.broadcast %cst_14 : f32 to vector<8x128xf32>
    %18 = arith.maximumf %16, %17 : vector<8x128xf32>
    %19 = arith.truncf %18 : vector<8x128xf32> to vector<8x128xbf16>
    %cst_15 = arith.constant dense<0.000000e+00> : vector<8x128xf32>
    %20 = tpu.matmul %19, %3, %cst_15 {dimension_numbers = #tpu.dot_dimension_numbers<[1], [0], [0], [1], [0, 0, 1, 1], [], []>} : vector<8x128xbf16>, vector<128x128xbf16>, vector<8x128xf32> -> vector<8x128xf32>
    %c2 = arith.constant 2 : index
    %c0_16 = arith.constant 0 : index
    %21 = vector.load %arg3[%c2, %c0_16] : memref<3x128xf32, #tpu.memory_space<vmem>>, vector<1x128xf32>
    %22 = vector.broadcast %21 : vector<1x128xf32> to vector<8x128xf32>
    %23 = arith.addf %20, %22 : vector<8x128xf32>
    %cst_17 = arith.constant 0.000000e+00 : f32
    %24 = vector.broadcast %cst_17 : f32 to vector<8x128xf32>
    %25 = arith.maximumf %23, %24 : vector<8x128xf32>
    %cst_18 = arith.constant 5.000000e-01 : f32
    %26 = vector.broadcast %cst_18 : f32 to vector<8x128xf32>
    %27 = arith.mulf %26, %25 : vector<8x128xf32>
    %28 = math.cos %27 : vector<8x128xf32>
    %29 = math.sin %27 : vector<8x128xf32>
    %c256 = arith.constant 256 : index
    %c0_19 = arith.constant 0 : index
    %30 = vector.load %arg4[%c256, %c0_19] : memref<264x128xf32, #tpu.memory_space<vmem>>, vector<4x128xf32>
    %31 = vector.extract_strided_slice %28 {offsets = [0, 0], sizes = [8, 1], strides = [1, 1]} : vector<8x128xf32> to vector<8x1xf32>
    %32 = vector.extract_strided_slice %29 {offsets = [0, 0], sizes = [8, 1], strides = [1, 1]} : vector<8x128xf32> to vector<8x1xf32>
    %33 = vector.extract_strided_slice %30 {offsets = [0, 0], sizes = [1, 128], strides = [1, 1]} : vector<4x128xf32> to vector<1x128xf32>
    %34 = arith.subf %32, %31 : vector<8x1xf32>
    %35 = vector.broadcast %34 : vector<8x1xf32> to vector<8x128xf32>
    %36 = vector.broadcast %33 : vector<1x128xf32> to vector<8x128xf32>
    %37 = arith.mulf %35, %36 : vector<8x128xf32>
    %38 = vector.broadcast %31 : vector<8x1xf32> to vector<8x128xf32>
    %39 = arith.addf %38, %37 : vector<8x128xf32>
    %40 = vector.extract_strided_slice %28 {offsets = [0, 1], sizes = [8, 1], strides = [1, 1]} : vector<8x128xf32> to vector<8x1xf32>
    %41 = vector.extract_strided_slice %29 {offsets = [0, 1], sizes = [8, 1], strides = [1, 1]} : vector<8x128xf32> to vector<8x1xf32>
    %42 = vector.extract_strided_slice %30 {offsets = [1, 0], sizes = [1, 128], strides = [1, 1]} : vector<4x128xf32> to vector<1x128xf32>
    %43 = arith.subf %41, %40 : vector<8x1xf32>
    %44 = vector.broadcast %43 : vector<8x1xf32> to vector<8x128xf32>
    %45 = vector.broadcast %42 : vector<1x128xf32> to vector<8x128xf32>
    %46 = arith.mulf %44, %45 : vector<8x128xf32>
    %47 = vector.broadcast %40 : vector<8x1xf32> to vector<8x128xf32>
    %48 = arith.addf %47, %46 : vector<8x128xf32>
    %49 = arith.mulf %39, %48 : vector<8x128xf32>
    %50 = vector.extract_strided_slice %28 {offsets = [0, 2], sizes = [8, 1], strides = [1, 1]} : vector<8x128xf32> to vector<8x1xf32>
    %51 = vector.extract_strided_slice %29 {offsets = [0, 2], sizes = [8, 1], strides = [1, 1]} : vector<8x128xf32> to vector<8x1xf32>
    %52 = vector.extract_strided_slice %30 {offsets = [2, 0], sizes = [1, 128], strides = [1, 1]} : vector<4x128xf32> to vector<1x128xf32>
    %53 = arith.subf %51, %50 : vector<8x1xf32>
    %54 = vector.broadcast %53 : vector<8x1xf32> to vector<8x128xf32>
    %55 = vector.broadcast %52 : vector<1x128xf32> to vector<8x128xf32>
    %56 = arith.mulf %54, %55 : vector<8x128xf32>
    %57 = vector.broadcast %50 : vector<8x1xf32> to vector<8x128xf32>
    %58 = arith.addf %57, %56 : vector<8x128xf32>
    %59 = arith.mulf %49, %58 : vector<8x128xf32>
    %60 = vector.extract_strided_slice %28 {offsets = [0, 3], sizes = [8, 1], strides = [1, 1]} : vector<8x128xf32> to vector<8x1xf32>
    %61 = vector.extract_strided_slice %29 {offsets = [0, 3], sizes = [8, 1], strides = [1, 1]} : vector<8x128xf32> to vector<8x1xf32>
    %62 = vector.extract_strided_slice %30 {offsets = [3, 0], sizes = [1, 128], strides = [1, 1]} : vector<4x128xf32> to vector<1x128xf32>
    %63 = arith.subf %61, %60 : vector<8x1xf32>
    %64 = vector.broadcast %63 : vector<8x1xf32> to vector<8x128xf32>
    %65 = vector.broadcast %62 : vector<1x128xf32> to vector<8x128xf32>
    %66 = arith.mulf %64, %65 : vector<8x128xf32>
    %67 = vector.broadcast %60 : vector<8x1xf32> to vector<8x128xf32>
    %68 = arith.addf %67, %66 : vector<8x128xf32>
    %69 = arith.mulf %59, %68 : vector<8x128xf32>
    %c0_20 = arith.constant 0 : index
    %c0_21 = arith.constant 0 : index
    %70 = vector.load %arg4[%c0_20, %c0_21] : memref<264x128xf32, #tpu.memory_space<vmem>>, vector<128x128xf32>
    %c128 = arith.constant 128 : index
    %c0_22 = arith.constant 0 : index
    %71 = vector.load %arg4[%c128, %c0_22] : memref<264x128xf32, #tpu.memory_space<vmem>>, vector<128x128xf32>
    %cst_23 = arith.constant dense<0.000000e+00> : vector<8x128xf32>
    %72 = tpu.matmul %69, %70, %cst_23 {dimension_numbers = #tpu.dot_dimension_numbers<[1], [0], [0], [1], [0, 0, 1, 1], [], []>} : vector<8x128xf32>, vector<128x128xf32>, vector<8x128xf32> -> vector<8x128xf32>
    %73 = arith.mulf %72, %72 : vector<8x128xf32>
    %cst_24 = arith.constant dense<0.000000e+00> : vector<8x128xf32>
    %74 = tpu.matmul %73, %71, %cst_24 {dimension_numbers = #tpu.dot_dimension_numbers<[1], [0], [0], [1], [0, 0, 1, 1], [], []>} : vector<8x128xf32>, vector<128x128xf32>, vector<8x128xf32> -> vector<8x128xf32>
    %c0_25 = arith.constant 0 : index
    %c0_26 = arith.constant 0 : index
    %75 = vector.load %arg5[%c0_25, %c0_26] : memref<8x128xf32, #tpu.memory_space<vmem>>, vector<8x128xf32>
    tpu.vector_store %arg5[%c0_25, %c0_26], %74 {strides = array<i32>} : memref<8x128xf32, #tpu.memory_space<vmem>>, vector<8x128xf32>,
    return
  }
}

</mosaic_0001>

<llo_original>
// kernel: quantumnet_forward.1
$region0: #{quantumnet_forward.1}
  #allocation0 [shape = 'u32[]', space=smem, size = 0x4, offset = 0x4, fixed_abs, tag = 'smem constant byte address 0x4 - core index']
  #allocation1 [shape = 'u32[144,128]{1,0:T(1,128)}', space=vmem, size = 0x12000, scoped, tag = 'internal scratch']
  %s0 = inlined_call_operand.hbm [shape: f32[8,32], index: 0, kind: input, shape index: {}]
  %s1 = inlined_call_operand.hbm [shape: f32[32,128], index: 1, kind: input, shape index: {}]
  %s2 = inlined_call_operand.hbm [shape: bf16[2,128,128], index: 2, kind: input, shape index: {}]
  %s3 = inlined_call_operand.vmem [shape: f32[3,128], index: 3, kind: input, shape index: {}]
  %s4 = inlined_call_operand.hbm [shape: f32[264,128], index: 4, kind: input, shape index: {}]
  %s5 = inlined_call_operand.vmem [shape: f32[8,128], index: 5, kind: output, shape index: {}]
  %s6 = sld [smem:[#allocation0]]
  $region46: #{quantumnet_forward.1} parent=0
    _
  %s8 = ssub.s32 1, %s6
  %s9 = scalar_select 0, %s8, %s6
  $region1: #{quantumnet_forward.1} parent=0
    #allocation2 [shape = 'u8[4096]{0}', space=vmem, size = 0x1000, scoped, tag = 'input window, operand 0, single buffered']
    #allocation3 [shape = 's32[1]{0}', space=sflag, size = 0x4, scoped, tag = 'scoped memory for quantumnet_forward.1']
    #allocation4 [shape = 'u8[16384]{0}', space=vmem, size = 0x4000, scoped, tag = 'input window, operand 1, single buffered']
    #allocation5 [shape = 's32[1]{0}', space=sflag, size = 0x4, scoped, tag = 'scoped memory for quantumnet_forward.1']
    #allocation6 [shape = 'u8[65536]{0}', space=vmem, size = 0x10000, scoped, tag = 'input window, operand 2, single buffered']
    #allocation7 [shape = 'u8[135168]{0}', space=vmem, size = 0x21000, scoped, tag = 'input window, operand 4, single buffered']
    #allocation8 [shape = 's32[1]{0}', space=sflag, size = 0x4, scoped, tag = 'scoped memory for quantumnet_forward.1']
    %10 = vsyncpa [#allocation3], 0
    %11 = vsyncpa [#allocation5], 0
    %12 = vsyncpa [#allocation8], 0
    // Predicated region
    $region2: #{quantumnet_forward.1} parent=1 // pred_check
      _
    $region3: #{quantumnet_forward.1} parent=1 // pred_check_branch
      %14 = sbr.rel (0) target = $region5
    $region4: #{quantumnet_forward.1} parent=1 // pred_region
      %s16 = ssub.s32 128, 128
      %17 = vsyncadd [#allocation3], %s16
      %s19 = sshll.u32 [#allocation2], 4
      %s20 = int_to_ptr.vmem [resolvable:$true] %s19
      %22 = dma.hbm_to_vmem [thread:$0]  %s0, 128, %s20, [#allocation3]
    $region5: #{quantumnet_forward.1} parent=1 // pred_fallthru
      _
    // Predicated region
    $region6: #{quantumnet_forward.1} parent=1 // pred_check
      _
    $region7: #{quantumnet_forward.1} parent=1 // pred_check_branch
      %24 = sbr.rel (0) target = $region9
    $region8: #{quantumnet_forward.1} parent=1 // pred_region
      %s26 = ssub.s32 512, 512
      %27 = vsyncadd [#allocation5], %s26
      %s28 = sshll.u32 [#allocation4], 4
      %s29 = int_to_ptr.vmem [resolvable:$true] %s28
      %34 = dma.hbm_to_vmem [thread:$0]  %s1, 512, %s29, [#allocation5], 128, 128, 8
    $region9: #{quantumnet_forward.1} parent=1 // pred_fallthru
      _
    // Predicated region
    $region10: #{quantumnet_forward.1} parent=1 // pred_check
      _
    $region11: #{quantumnet_forward.1} parent=1 // pred_check_branch
      %36 = sbr.rel (0) target = $region13
    $region12: #{quantumnet_forward.1} parent=1 // pred_region
      %s38 = ssub.s32 2048, 2048
      %39 = vsyncadd [#allocation5], %s38
      %s40 = sshll.u32 [#allocation6], 4
      %s41 = int_to_ptr.vmem [resolvable:$true] %s40
      %46 = dma.hbm_to_vmem [thread:$0]  %s2, 2048, %s41, [#allocation5], 64, 64, 4
    $region13: #{quantumnet_forward.1} parent=1 // pred_fallthru
      _
    // Predicated region
    $region14: #{quantumnet_forward.1} parent=1 // pred_check
      _
    $region15: #{quantumnet_forward.1} parent=1 // pred_check_branch
      %48 = sbr.rel (0) target = $region17
    $region16: #{quantumnet_forward.1} parent=1 // pred_region
      _
    $region17: #{quantumnet_forward.1} parent=1 // pred_fallthru
      _
    // Predicated region
    $region18: #{quantumnet_forward.1} parent=1 // pred_check
      _
    $region19: #{quantumnet_forward.1} parent=1 // pred_check_branch
      %50 = sbr.rel (0) target = $region21
    $region20: #{quantumnet_forward.1} parent=1 // pred_region
      %s52 = ssub.s32 4224, 4224
      %53 = vsyncadd [#allocation8], %s52
      %s54 = sshll.u32 [#allocation7], 4
      %s55 = int_to_ptr.vmem [resolvable:$true] %s54
      %60 = dma.hbm_to_vmem [thread:$0]  %s4, 4224, %s55, [#allocation8], 128, 128, 8
    $region21: #{quantumnet_forward.1} parent=1 // pred_fallthru
      _
    // Predicated region
    $region22: #{quantumnet_forward.1} parent=1 // pred_check
      _
    $region23: #{quantumnet_forward.1} parent=1 // pred_check_branch
      %62 = sbr.rel (0) target = $region25
    $region24: #{quantumnet_forward.1} parent=1 // pred_region
      %63 = dma.done [#allocation3], 128
    $region25: #{quantumnet_forward.1} parent=1 // pred_fallthru
      _
    // Predicated region
    $region26: #{quantumnet_forward.1} parent=1 // pred_check
      _
    $region27: #{quantumnet_forward.1} parent=1 // pred_check_branch
      %65 = sbr.rel (0) target = $region29
    $region28: #{quantumnet_forward.1} parent=1 // pred_region
      %66 = dma.done [#allocation5], 512
    $region29: #{quantumnet_forward.1} parent=1 // pred_fallthru
      _
    // Predicated region
    $region30: #{quantumnet_forward.1} parent=1 // pred_check
      _
    $region31: #{quantumnet_forward.1} parent=1 // pred_check_branch
      %68 = sbr.rel (0) target = $region33
    $region32: #{quantumnet_forward.1} parent=1 // pred_region
      %69 = dma.done [#allocation5], 2048
    $region33: #{quantumnet_forward.1} parent=1 // pred_fallthru
      _
    // Predicated region
    $region34: #{quantumnet_forward.1} parent=1 // pred_check
      _
    $region35: #{quantumnet_forward.1} parent=1 // pred_check_branch
      %71 = sbr.rel (0) target = $region37
    $region36: #{quantumnet_forward.1} parent=1 // pred_region
      %72 = dma.done [#allocation8], 4224
    $region37: #{quantumnet_forward.1} parent=1 // pred_fallthru
      _
    %v74 = vld [vmem:[#allocation6] sm:$0xf]
    %v75 = vld [vmem:[#allocation6 + $0x4] sm:$0xf]
    %v76 = vld [vmem:[#allocation6 + $0x8] sm:$0xf]
    %v77 = vld [vmem:[#allocation6 + $0xc] sm:$0xf]
    %v78 = vld [vmem:[#allocation6 + $0x10] sm:$0xf]
    %v79 = vld [vmem:[#allocation6 + $0x14] sm:$0xf]
    %v80 = vld [vmem:[#allocation6 + $0x18] sm:$0xf]
    %v81 = vld [vmem:[#allocation6 + $0x1c] sm:$0xf]
    %v82 = vld [vmem:[#allocation6 + $0x20] sm:$0xf]
    %v83 = vld [vmem:[#allocation6 + $0x24] sm:$0xf]
    %v84 = vld [vmem:[#allocation6 + $0x28] sm:$0xf]
    %v85 = vld [vmem:[#allocation6 + $0x2c] sm:$0xf]
    %v86 = vld [vmem:[#allocation6 + $0x30] sm:$0xf]
    %v87 = vld [vmem:[#allocation6 + $0x34] sm:$0xf]
    %v88 = vld [vmem:[#allocation6 + $0x38] sm:$0xf]
    %v89 = vld [vmem:[#allocation6 + $0x3c] sm:$0xf]
    %s90 = scalar_lea.vmem [#allocation6], 64
    %v91 = vld [vmem:[%s90] sm:$0xf]
    %v92 = vld [vmem:[%s90 + $0x4] sm:$0xf]
    %v93 = vld [vmem:[%s90 + $0x8] sm:$0xf]
    %v94 = vld [vmem:[%s90 + $0xc] sm:$0xf]
    %v95 = vld [vmem:[%s90 + $0x10] sm:$0xf]
    %v96 = vld [vmem:[%s90 + $0x14] sm:$0xf]
    %v97 = vld [vmem:[%s90 + $0x18] sm:$0xf]
    %v98 = vld [vmem:[%s90 + $0x1c] sm:$0xf]
    %v99 = vld [vmem:[%s90 + $0x20] sm:$0xf]
    %v100 = vld [vmem:[%s90 + $0x24] sm:$0xf]
    %v101 = vld [vmem:[%s90 + $0x28] sm:$0xf]
    %v102 = vld [vmem:[%s90 + $0x2c] sm:$0xf]
    %v103 = vld [vmem:[%s90 + $0x30] sm:$0xf]
    %v104 = vld [vmem:[%s90 + $0x34] sm:$0xf]
    %v105 = vld [vmem:[%s90 + $0x38] sm:$0xf]
    %v106 = vld [vmem:[%s90 + $0x3c] sm:$0xf]
    %v107 = vld [vmem:[#allocation2] sm:$0xff]
    %v108 = vld [vmem:[#allocation4] sm:$0xff]
    %v109 = vld [vmem:[#allocation4 + $0x8] sm:$0xff]
    %v110 = vld [vmem:[#allocation4 + $0x10] sm:$0xff]
    %v111 = vld [vmem:[#allocation4 + $0x18] sm:$0xff]
    %v112 = vld [vmem:[%s3] sm:$0x1]
    %v113 = vlaneseq
    %v114 = vshrl.u32 %v113, 7
    %v115 = vsub.s32 0, %v114
    %v116 = vrot.slane %v112, %v115
    %vm117 = vcmask 261120
    %v119 = vsel %vm117, %v107, 0
    %121 = vmatprep.subr.mxu0 0.0
    %122 = vmatpush1.msra.mxu0 %v108
    %123 = vmatprep.subr.mxu0 0.0
    %124 = vmatpush1.msra.mxu0 %v109
    %125 = vmatprep.subr.mxu0 0.0
    %126 = vmatpush1.msra.mxu0 %v110
    %127 = vmatprep.subr.mxu0 0.0
    %128 = vmatpush1.msra.mxu0 %v111
    %129 = vmatprep.subr.mxu0 0.0
    %130 = vmatpush1.msra.mxu0 0.0
    %131 = vmatprep.subr.mxu0 0.0
    %132 = vmatpush1.msra.mxu0 0.0
    %133 = vmatprep.subr.mxu0 0.0
    %134 = vmatpush1.msra.mxu0 0.0
    %135 = vmatprep.subr.mxu0 0.0
    %136 = vmatpush1.msra.mxu0 0.0
    %137 = vmatprep.subr.mxu0 0.0
    %138 = vmatpush1.msra.mxu0 0.0
    %139 = vmatprep.subr.mxu0 0.0
    %140 = vmatpush1.msra.mxu0 0.0
    %141 = vmatprep.subr.mxu0 0.0
    %142 = vmatpush1.msra.mxu0 0.0
    %143 = vmatprep.subr.mxu0 0.0
    %144 = vmatpush1.msra.mxu0 0.0
    %145 = vmatprep.subr.mxu0 0.0
    %146 = vmatpush1.msra.mxu0 0.0
    %147 = vmatprep.subr.mxu0 0.0
    %148 = vmatpush1.msra.mxu0 0.0
    %149 = vmatprep.subr.mxu0 0.0
    %150 = vmatpush1.msra.mxu0 0.0
    %151 = vmatprep.subr.mxu0 0.0
    %152 = vmatpush1.msra.mxu0 0.0
    %153 = vmatprep.subr.mxu0 0.0
    %154 = vmatpush1.msra.mxu0 0.0
    %155 = vmatprep.subr.mxu0 0.0
    %156 = vmatpush1.msra.mxu0 0.0
    %157 = vmatprep.subr.mxu0 0.0
    %158 = vmatpush1.msra.mxu0 0.0
    %159 = vmatprep.subr.mxu0 0.0
    %160 = vmatpush1.msra.mxu0 0.0
    %161 = vmatprep.subr.mxu0 0.0
    %162 = vmatpush1.msra.mxu0 0.0
    %163 = vmatprep.subr.mxu0 0.0
    %164 = vmatpush1.msra.mxu0 0.0
    %165 = vmatprep.subr.mxu0 0.0
    %166 = vmatpush1.msra.mxu0 0.0
    %167 = vmatprep.subr.mxu0 0.0
    %168 = vmatpush1.msra.mxu0 0.0
    %169 = vmatprep.subr.mxu0 0.0
    %170 = vmatpush1.msra.mxu0 0.0
    %171 = vmatprep.subr.mxu0 0.0
    %172 = vmatpush1.msra.mxu0 0.0
    %173 = vmatprep.subr.mxu0 0.0
    %174 = vmatpush1.msra.mxu0 0.0
    %175 = vmatprep.subr.mxu0 0.0
    %176 = vmatpush1.msra.mxu0 0.0
    %177 = vmatprep.subr.mxu0 0.0
    %178 = vmatpush1.msra.mxu0 0.0
    %179 = vmatprep.subr.mxu0 0.0
    %180 = vmatpush1.msra.mxu0 0.0
    %181 = vmatprep.subr.mxu0 0.0
    %182 = vmatpush1.msra.mxu0 0.0
    %183 = vmatprep.subr.mxu0 0.0
    %184 = vmatpush1.msra.mxu0 0.0
    %185 = vmatprep.mubr.f32.mxu0 0.0
    %186 = vmatmul.mubr.f32.gmra.mrb[0].mxu0 %v119
    %v187 = vpop.f32.mrb[0].mxu0
    %v188 = vadd.f32 %v116, %v187
    %v189 = vpop.f32.mrb[0].mxu0
    %190 = vdwg.mxu0
    %v191 = vmax.f32 %v188, 0.0
    %v192 = vpack.c.bf16 %v191, %v191
    %v193 = vld [vmem:[%s3 + $0x1] sm:$0x1]
    %v194 = vlaneseq
    %v195 = vshrl.u32 %v194, 7
    %v196 = vsub.s32 0, %v195
    %v197 = vrot.slane %v193, %v196
    %v214 = vunpack.c.l.b16 %v74
    %v215 = vunpack.c.l.b16 %v75
    %v216 = vunpack.c.l.b16 %v76
    %v217 = vunpack.c.l.b16 %v77
    %v218 = vunpack.c.l.b16 %v78
    %v219 = vunpack.c.l.b16 %v79
    %v220 = vunpack.c.l.b16 %v80
    %v221 = vunpack.c.l.b16 %v81
    %v222 = vunpack.c.l.b16 %v82
    %v223 = vunpack.c.l.b16 %v83
    %v224 = vunpack.c.l.b16 %v84
    %v225 = vunpack.c.l.b16 %v85
    %v226 = vunpack.c.l.b16 %v86
    %v227 = vunpack.c.l.b16 %v87
    %v228 = vunpack.c.l.b16 %v88
    %v229 = vunpack.c.l.b16 %v89
    %v230 = vpack.c.b16 %v215, %v214
    %v231 = vpack.c.b16 %v217, %v216
    %v232 = vpack.c.b16 %v219, %v218
    %v233 = vpack.c.b16 %v221, %v220
    %v234 = vpack.c.b16 %v223, %v222
    %v235 = vpack.c.b16 %v225, %v224
    %v236 = vpack.c.b16 %v227, %v226
    %v237 = vpack.c.b16 %v229, %v228
    %246 = vmatprep.subr.bf16.mxu0 0
    %247 = vmatpush1.bf16.msra.mxu0 %v230
    %248 = vmatprep.subr.bf16.mxu0 0
    %249 = vmatpush1.bf16.msra.mxu0 %v231
    %250 = vmatprep.subr.bf16.mxu0 0
    %251 = vmatpush1.bf16.msra.mxu0 %v232
    %252 = vmatprep.subr.bf16.mxu0 0
    %253 = vmatpush1.bf16.msra.mxu0 %v233
    %254 = vmatprep.subr.bf16.mxu0 0
    %255 = vmatpush1.bf16.msra.mxu0 %v234
    %256 = vmatprep.subr.bf16.mxu0 0
    %257 = vmatpush1.bf16.msra.mxu0 %v235
    %258 = vmatprep.subr.bf16.mxu0 0
    %259 = vmatpush1.bf16.msra.mxu0 %v236
    %260 = vmatprep.subr.bf16.mxu0 0
    %261 = vmatpush1.bf16.msra.mxu0 %v237
    %262 = vmatprep.subr.bf16.mxu0 0
    %263 = vmatpush1.bf16.msra.mxu0 0
    %264 = vmatprep.subr.bf16.mxu0 0
    %265 = vmatpush1.bf16.msra.mxu0 0
    %266 = vmatprep.subr.bf16.mxu0 0
    %267 = vmatpush1.bf16.msra.mxu0 0
    %268 = vmatprep.subr.bf16.mxu0 0
    %269 = vmatpush1.bf16.msra.mxu0 0
    %270 = vmatprep.subr.bf16.mxu0 0
    %271 = vmatpush1.bf16.msra.mxu0 0
    %272 = vmatprep.subr.bf16.mxu0 0
    %273 = vmatpush1.bf16.msra.mxu0 0
    %274 = vmatprep.subr.bf16.mxu0 0
    %275 = vmatpush1.bf16.msra.mxu0 0
    %276 = vmatprep.subr.bf16.mxu0 0
    %277 = vmatpush1.bf16.msra.mxu0 0
    %278 = vmatprep.mubr.bf16.mxu0 0
    %279 = vmatmul.mubr.bf16.gmra.mrb[0].mxu0 %v192
    %v280 = vpop.f32.mrb[0].mxu0
    %v281 = vadd.f32 %v197, %v280
    %v282 = vpop.f32.mrb[0].mxu0
    %v283 = vpop.f32.mrb[0].mxu0
    %v284 = vpop.f32.mrb[0].mxu0
    %285 = vdwg.mxu0
    %v286 = vmax.f32 %v281, 0.0
    %v287 = vpack.c.bf16 %v286, %v286
    %v288 = vld [vmem:[%s3 + $0x2] sm:$0x1]
    %v289 = vlaneseq
    %v290 = vshrl.u32 %v289, 7
    %v291 = vsub.s32 0, %v290
    %v292 = vrot.slane %v288, %v291
    %v309 = vunpack.c.l.b16 %v91
    %v310 = vunpack.c.l.b16 %v92
    %v311 = vunpack.c.l.b16 %v93
    %v312 = vunpack.c.l.b16 %v94
    %v313 = vunpack.c.l.b16 %v95
    %v314 = vunpack.c.l.b16 %v96
    %v315 = vunpack.c.l.b16 %v97
    %v316 = vunpack.c.l.b16 %v98
    %v317 = vunpack.c.l.b16 %v99
    %v318 = vunpack.c.l.b16 %v100
    %v319 = vunpack.c.l.b16 %v101
    %v320 = vunpack.c.l.b16 %v102
    %v321 = vunpack.c.l.b16 %v103
    %v322 = vunpack.c.l.b16 %v104
    %v323 = vunpack.c.l.b16 %v105
    %v324 = vunpack.c.l.b16 %v106
    %v325 = vpack.c.b16 %v310, %v309
    %v326 = vpack.c.b16 %v312, %v311
    %v327 = vpack.c.b16 %v314, %v313
    %v328 = vpack.c.b16 %v316, %v315
    %v329 = vpack.c.b16 %v318, %v317
    %v330 = vpack.c.b16 %v320, %v319
    %v331 = vpack.c.b16 %v322, %v321
    %v332 = vpack.c.b16 %v324, %v323
    %341 = vmatprep.subr.bf16.mxu0 0
    %342 = vmatpush1.bf16.msra.mxu0 %v325
    %343 = vmatprep.subr.bf16.mxu0 0
    %344 = vmatpush1.bf16.msra.mxu0 %v326
    %345 = vmatprep.subr.bf16.mxu0 0
    %346 = vmatpush1.bf16.msra.mxu0 %v327
    %347 = vmatprep.subr.bf16.mxu0 0
    %348 = vmatpush1.bf16.msra.mxu0 %v328
    %349 = vmatprep.subr.bf16.mxu0 0
    %350 = vmatpush1.bf16.msra.mxu0 %v329
    %351 = vmatprep.subr.bf16.mxu0 0
    %352 = vmatpush1.bf16.msra.mxu0 %v330
    %353 = vmatprep.subr.bf16.mxu0 0
    %354 = vmatpush1.bf16.msra.mxu0 %v331
    %355 = vmatprep.subr.bf16.mxu0 0
    %356 = vmatpush1.bf16.msra.mxu0 %v332
    %357 = vmatprep.subr.bf16.mxu0 0
    %358 = vmatpush1.bf16.msra.mxu0 0
    %359 = vmatprep.subr.bf16.mxu0 0
    %360 = vmatpush1.bf16.msra.mxu0 0
    %361 = vmatprep.subr.bf16.mxu0 0
    %362 = vmatpush1.bf16.msra.mxu0 0
    %363 = vmatprep.subr.bf16.mxu0 0
    %364 = vmatpush1.bf16.msra.mxu0 0
    %365 = vmatprep.subr.bf16.mxu0 0
    %366 = vmatpush1.bf16.msra.mxu0 0
    %367 = vmatprep.subr.bf16.mxu0 0
    %368 = vmatpush1.bf16.msra.mxu0 0
    %369 = vmatprep.subr.bf16.mxu0 0
    %370 = vmatpush1.bf16.msra.mxu0 0
    %371 = vmatprep.subr.bf16.mxu0 0
    %372 = vmatpush1.bf16.msra.mxu0 0
    %373 = vmatprep.mubr.bf16.mxu0 0
    %374 = vmatmul.mubr.bf16.gmra.mrb[0].mxu0 %v287
    %v375 = vpop.f32.mrb[0].mxu0
    %v376 = vadd.f32 %v292, %v375
    %v377 = vpop.f32.mrb[0].mxu0
    %v378 = vpop.f32.mrb[0].mxu0
    %v379 = vpop.f32.mrb[0].mxu0
    %380 = vdwg.mxu0
    %v381 = vmax.f32 %v376, 0.0
    %v382 = vmul.f32 %v381, 0.5
    %v383 = vand.u32 2147483647, %v382
    %vm384 = vcmp.le.f32.partialorder %v383, 0.7853982
    %vm385 = vcmp.lt.s32.totalorder %v382, 0
    %v386 = vand.u32 %v382, 2139095040
    %v387 = vshrl.u32 %v386, 23
    %v388 = vsub.s32 %v387, 127
    %v389 = vand.u32 2147483647, %v382
    %v390 = vand.u32 %v389, 8388607
    %v391 = vor.u32 %v390, 8388608
    %v392 = vsub.s32 0, %v391
    %v393 = vadd.s32 %v388, 1
    %vm394 = vcmp.gt.s32.totalorder %v393, 0
    %v395 = vsel %vm394, %v393, 0
    %v396 = vshrl.u32 %v395, 5
    %v397 = vand.u32 %v395, 31
    %v398 = vsub.s32 32, %v397
    %v399 = vshrl.u32 683565275, %v398
    %v400 = vshll.u32 683565275, %v397
    %v401 = vshrl.u32 2475754826, %v398
    %v402 = vor.u32 %v400, %v401
    %v403 = vshll.u32 2475754826, %v397
    %v404 = vshrl.u32 2131351028, %v398
    %v405 = vor.u32 %v403, %v404
    %v406 = vshll.u32 2131351028, %v397
    %v407 = vshrl.u32 2102212464, %v398
    %v408 = vor.u32 %v406, %v407
    %v409 = vshll.u32 2102212464, %v397
    %v410 = vshrl.u32 920167782, %v398
    %v411 = vor.u32 %v409, %v410
    %v412 = vshll.u32 920167782, %v397
    %v413 = vshrl.u32 1326507024, %v398
    %v414 = vor.u32 %v412, %v413
    %vm415 = vcmp.lt.s32.totalorder %v396, 1
    %vm416 = vcmp.lt.s32.totalorder %v396, 2
    %vm417 = vcmp.lt.s32.totalorder %v396, 3
    %vm418 = vcmp.lt.s32.totalorder %v396, 4
    %v419 = vsel %vm415, %v399, %v402
    %v420 = vsel %vm418, %v408, 2102212464
    %v421 = vsel %vm417, %v405, %v420
    %v422 = vsel %vm416, %v419, %v421
    %v423 = vsel %vm415, %v402, %v405
    %v424 = vsel %vm418, %v411, 920167782
    %v425 = vsel %vm417, %v408, %v424
    %v426 = vsel %vm416, %v423, %v425
    %v427 = vsel %vm415, %v405, %v408
    %v428 = vsel %vm418, %v414, 1326507024
    %v429 = vsel %vm417, %v411, %v428
    %v430 = vsel %vm416, %v427, %v429
    %v431 = vshll.u32 %v391, 8
    %v432 = vmul.u32.u64.compose %v431, %v430
    %v433 = vextract.low.u32 %v432
    %v434 = vextract.high.u32 %v432
    %v435 = vmul.u32.u64.compose %v431, %v426
    %v436 = vextract.low.u32 %v435
    %v437 = vextract.high.u32 %v435
    %v438 = vmul.u32 %v431, %v422
    %v439 = vadd.s32 %v434, %v436
    %vm440 = vc.u32 %v434, %v436
    %v441 = vadd.s32 %v437, 1
    %v442 = vsel %vm440, %v441, %v437
    %v443 = vadd.s32 %v438, %v442
    %v444 = vadd.s32 %v443, 536870912
    %v445 = vshrl.u32 %v444, 30
    %v446 = vshll.u32 %v445, 30
    %v447 = vsub.s32 %v443, %v446
    %vm448 = vcmp.lt.s32.totalorder %v447, 0
    %v449 = vsub.s32 0, %v447
    %v450 = vsel %vm448, %v449, %v447
    %v451 = vclz %v450
    %v452 = vsub.s32 %v451, 2
    %vm453 = vcmp.gt.s32.totalorder 0, %v452
    %v454 = vsel %vm453, 0, %v452
    %v455 = vsub.s32 32, %v454
    %v456 = vshll.u32 %v447, %v454
    %v457 = vshrl.u32 %v439, %v455
    %v458 = vor.u32 %v456, %v457
    %v459 = vsub.s32 4294967266, %v454
    %v460 = vadd.s32 %v459, 127
    %v461 = vshll.u32 %v460, 23
    %v462 = vor.u32 4788187, %v461
    %v463 = vand.u32 2147483647, %v462
    %v465 = vcvt.s32.f32 %v458
    %v466 = vmul.f32 %v465, %v463
    %v467 = vxor.u32 %v466, 2147483648
    %v468 = vsel %vm385, %v467, %v466
    %v469 = vsub.s32 4, %v445
    %v470 = vsel %vm385, %v469, %v445
    %v471 = vsel %vm384, %v382, %v468
    %v472 = vsel %vm384, 0, %v470
    %v473 = vcosq.f32.pop %v471
    %v474 = vsinq.f32.pop %v471
    %vm475 = vweird.f32 %v382
    %v476 = vand.u32 %v472, 3
    %vm477 = vcmp.lt.s32.totalorder %v476, 2
    %vm478 = vcmp.eq.s32.totalorder %v476, 0
    %v479 = vxor.u32 %v474, 2147483648
    %v480 = vsel %vm478, %v473, %v479
    %vm481 = vcmp.eq.s32.totalorder %v476, 2
    %v482 = vxor.u32 %v473, 2147483648
    %v483 = vsel %vm481, %v482, %v474
    %v484 = vsel %vm477, %v480, %v483
    %v485 = vsel %vm475, nan, %v484
    %v486 = vand.u32 2147483647, %v382
    %vm487 = vcmp.le.f32.partialorder %v486, 0.7853982
    %vm488 = vcmp.lt.s32.totalorder %v382, 0
    %v489 = vand.u32 %v382, 2139095040
    %v490 = vshrl.u32 %v489, 23
    %v491 = vsub.s32 %v490, 127
    %v492 = vand.u32 2147483647, %v382
    %v493 = vand.u32 %v492, 8388607
    %v494 = vor.u32 %v493, 8388608
    %v495 = vsub.s32 0, %v494
    %v496 = vadd.s32 %v491, 1
    %vm497 = vcmp.gt.s32.totalorder %v496, 0
    %v498 = vsel %vm497, %v496, 0
    %v499 = vshrl.u32 %v498, 5
    %v500 = vand.u32 %v498, 31
    %v501 = vsub.s32 32, %v500
    %v502 = vshrl.u32 683565275, %v501
    %v503 = vshll.u32 683565275, %v500
    %v504 = vshrl.u32 2475754826, %v501
    %v505 = vor.u32 %v503, %v504
    %v506 = vshll.u32 2475754826, %v500
    %v507 = vshrl.u32 2131351028, %v501
    %v508 = vor.u32 %v506, %v507
    %v509 = vshll.u32 2131351028, %v500
    %v510 = vshrl.u32 2102212464, %v501
    %v511 = vor.u32 %v509, %v510
    %v512 = vshll.u32 2102212464, %v500
    %v513 = vshrl.u32 920167782, %v501
    %v514 = vor.u32 %v512, %v513
    %v515 = vshll.u32 920167782, %v500
    %v516 = vshrl.u32 1326507024, %v501
    %v517 = vor.u32 %v515, %v516
    %vm518 = vcmp.lt.s32.totalorder %v499, 1
    %vm519 = vcmp.lt.s32.totalorder %v499, 2
    %vm520 = vcmp.lt.s32.totalorder %v499, 3
    %vm521 = vcmp.lt.s32.totalorder %v499, 4
    %v522 = vsel %vm518, %v502, %v505
    %v523 = vsel %vm521, %v511, 2102212464
    %v524 = vsel %vm520, %v508, %v523
    %v525 = vsel %vm519, %v522, %v524
    %v526 = vsel %vm518, %v505, %v508
    %v527 = vsel %vm521, %v514, 920167782
    %v528 = vsel %vm520, %v511, %v527
    %v529 = vsel %vm519, %v526, %v528
    %v530 = vsel %vm518, %v508, %v511
    %v531 = vsel %vm521, %v517, 1326507024
    %v532 = vsel %vm520, %v514, %v531
    %v533 = vsel %vm519, %v530, %v532
    %v534 = vshll.u32 %v494, 8
    %v535 = vmul.u32.u64.compose %v534, %v533
    %v536 = vextract.low.u32 %v535
    %v537 = vextract.high.u32 %v535
    %v538 = vmul.u32.u64.compose %v534, %v529
    %v539 = vextract.low.u32 %v538
    %v540 = vextract.high.u32 %v538
    %v541 = vmul.u32 %v534, %v525
    %v542 = vadd.s32 %v537, %v539
    %vm543 = vc.u32 %v537, %v539
    %v544 = vadd.s32 %v540, 1
    %v545 = vsel %vm543, %v544, %v540
    %v546 = vadd.s32 %v541, %v545
    %v547 = vadd.s32 %v546, 536870912
    %v548 = vshrl.u32 %v547, 30
    %v549 = vshll.u32 %v548, 30
    %v550 = vsub.s32 %v546, %v549
    %vm551 = vcmp.lt.s32.totalorder %v550, 0
    %v552 = vsub.s32 0, %v550
    %v553 = vsel %vm551, %v552, %v550
    %v554 = vclz %v553
    %v555 = vsub.s32 %v554, 2
    %vm556 = vcmp.gt.s32.totalorder 0, %v555
    %v557 = vsel %vm556, 0, %v555
    %v558 = vsub.s32 32, %v557
    %v559 = vshll.u32 %v550, %v557
    %v560 = vshrl.u32 %v542, %v558
    %v561 = vor.u32 %v559, %v560
    %v562 = vsub.s32 4294967266, %v557
    %v563 = vadd.s32 %v562, 127
    %v564 = vshll.u32 %v563, 23
    %v565 = vor.u32 4788187, %v564
    %v566 = vand.u32 2147483647, %v565
    %v568 = vcvt.s32.f32 %v561
    %v569 = vmul.f32 %v568, %v566
    %v570 = vxor.u32 %v569, 2147483648
    %v571 = vsel %vm488, %v570, %v569
    %v572 = vsub.s32 4, %v548
    %v573 = vsel %vm488, %v572, %v548
    %v574 = vsel %vm487, %v382, %v571
    %v575 = vsel %vm487, 0, %v573
    %v576 = vcosq.f32.pop %v574
    %v577 = vsinq.f32.pop %v574
    %vm578 = vweird.f32 %v382
    %v579 = vadd.s32 %v575, 3
    %v580 = vand.u32 %v579, 3
    %vm581 = vcmp.lt.s32.totalorder %v580, 2
    %vm582 = vcmp.eq.s32.totalorder %v580, 0
    %v583 = vxor.u32 %v577, 2147483648
    %v584 = vsel %vm582, %v576, %v583
    %vm585 = vcmp.eq.s32.totalorder %v580, 2
    %v586 = vxor.u32 %v576, 2147483648
    %v587 = vsel %vm585, %v586, %v577
    %v588 = vsel %vm581, %v584, %v587
    %v589 = vsel %vm578, nan, %v588
    %v590 = vld [vmem:[#allocation7 + $0x100] sm:$0xf]
    %v591 = vsub.f32 %v589, %v485
    %593 = vset.pattern.permute.xlu0 0
    %594 = vperm.xlu0 %593, %v591
    %v595 = vpop.permute.xlu0 %594
    %v597 = vlaneseq
    %v598 = vshrl.u32 %v597, 7
    %v599 = vsub.s32 0, %v598
    %v600 = vrot.slane %v590, %v599
    %v601 = vmul.f32 %v595, %v600
    %603 = vset.pattern.permute.xlu0 0
    %604 = vperm.xlu0 %603, %v485
    %v605 = vpop.permute.xlu0 %604
    %v607 = vadd.f32 %v605, %v601
    %608 = vset.pattern.permute.xlu0 1
    %609 = vperm.xlu0 %608, %v591
    %v610 = vpop.permute.xlu0 %609
    %v612 = vlaneseq
    %v613 = vshrl.u32 %v612, 7
    %v614 = vsub.s32 1, %v613
    %v615 = vrot.slane %v590, %v614
    %v616 = vmul.f32 %v610, %v615
    %617 = vset.pattern.permute.xlu0 1
    %618 = vperm.xlu0 %617, %v485
    %v619 = vpop.permute.xlu0 %618
    %v621 = vadd.f32 %v619, %v616
    %v622 = vmul.f32 %v607, %v621
    %623 = vset.pattern.permute.xlu0 2
    %624 = vperm.xlu0 %623, %v591
    %v625 = vpop.permute.xlu0 %624
    %v627 = vlaneseq
    %v628 = vshrl.u32 %v627, 7
    %v629 = vsub.s32 2, %v628
    %v630 = vrot.slane %v590, %v629
    %v631 = vmul.f32 %v625, %v630
    %632 = vset.pattern.permute.xlu0 2
    %633 = vperm.xlu0 %632, %v485
    %v634 = vpop.permute.xlu0 %633
    %v636 = vadd.f32 %v634, %v631
    %v637 = vmul.f32 %v622, %v636
    %638 = vset.pattern.permute.xlu0 3
    %639 = vperm.xlu0 %638, %v591
    %v640 = vpop.permute.xlu0 %639
    %v642 = vlaneseq
    %v643 = vshrl.u32 %v642, 7
    %v644 = vsub.s32 3, %v643
    %v645 = vrot.slane %v590, %v644
    %v646 = vmul.f32 %v640, %v645
    %647 = vset.pattern.permute.xlu0 3
    %648 = vperm.xlu0 %647, %v485
    %v649 = vpop.permute.xlu0 %648
    %v651 = vadd.f32 %v649, %v646
    %v652 = vmul.f32 %v637, %v651
    %v653 = vld [vmem:[#allocation7] sm:$0xff]
    %v654 = vld [vmem:[#allocation7 + $0x8] sm:$0xff]
    %v655 = vld [vmem:[#allocation7 + $0x10] sm:$0xff]
    %v656 = vld [vmem:[#allocation7 + $0x18] sm:$0xff]
    %v657 = vld [vmem:[#allocation7 + $0x20] sm:$0xff]
    %v658 = vld [vmem:[#allocation7 + $0x28] sm:$0xff]
    %v659 = vld [vmem:[#allocation7 + $0x30] sm:$0xff]
    %v660 = vld [vmem:[#allocation7 + $0x38] sm:$0xff]
    %v661 = vld [vmem:[#allocation7 + $0x40] sm:$0xff]
    %v662 = vld [vmem:[#allocation7 + $0x48] sm:$0xff]
    %v663 = vld [vmem:[#allocation7 + $0x50] sm:$0xff]
    %v664 = vld [vmem:[#allocation7 + $0x58] sm:$0xff]
    %v665 = vld [vmem:[#allocation7 + $0x60] sm:$0xff]
    %v666 = vld [vmem:[#allocation7 + $0x68] sm:$0xff]
    %v667 = vld [vmem:[#allocation7 + $0x70] sm:$0xff]
    %v668 = vld [vmem:[#allocation7 + $0x78] sm:$0xff]
    %v669 = vld [vmem:[#allocation7 + $0x80] sm:$0xff]
    %v670 = vld [vmem:[#allocation7 + $0x88] sm:$0xff]
    %v671 = vld [vmem:[#allocation7 + $0x90] sm:$0xff]
    %v672 = vld [vmem:[#allocation7 + $0x98] sm:$0xff]
    %v673 = vld [vmem:[#allocation7 + $0xa0] sm:$0xff]
    %v674 = vld [vmem:[#allocation7 + $0xa8] sm:$0xff]
    %v675 = vld [vmem:[#allocation7 + $0xb0] sm:$0xff]
    %v676 = vld [vmem:[#allocation7 + $0xb8] sm:$0xff]
    %v677 = vld [vmem:[#allocation7 + $0xc0] sm:$0xff]
    %v678 = vld [vmem:[#allocation7 + $0xc8] sm:$0xff]
    %v679 = vld [vmem:[#allocation7 + $0xd0] sm:$0xff]
    %v680 = vld [vmem:[#allocation7 + $0xd8] sm:$0xff]
    %v681 = vld [vmem:[#allocation7 + $0xe0] sm:$0xff]
    %v682 = vld [vmem:[#allocation7 + $0xe8] sm:$0xff]
    %v683 = vld [vmem:[#allocation7 + $0xf0] sm:$0xff]
    %v684 = vld [vmem:[#allocation7 + $0xf8] sm:$0xff]
    %685 = vmatprep.subr.mxu0 0.0
    %686 = vmatpush1.msra.mxu0 %v653
    %687 = vmatprep.subr.mxu0 0.0
    %688 = vmatpush1.msra.mxu0 %v654
    %689 = vmatprep.subr.mxu0 0.0
    %690 = vmatpush1.msra.mxu0 %v655
    %691 = vmatprep.subr.mxu0 0.0
    %692 = vmatpush1.msra.mxu0 %v656
    %693 = vmatprep.subr.mxu0 0.0
    %694 = vmatpush1.msra.mxu0 %v657
    %695 = vmatprep.subr.mxu0 0.0
    %696 = vmatpush1.msra.mxu0 %v658
    %697 = vmatprep.subr.mxu0 0.0
    %698 = vmatpush1.msra.mxu0 %v659
    %699 = vmatprep.subr.mxu0 0.0
    %700 = vmatpush1.msra.mxu0 %v660
    %701 = vmatprep.subr.mxu0 0.0
    %702 = vmatpush1.msra.mxu0 %v661
    %703 = vmatprep.subr.mxu0 0.0
    %704 = vmatpush1.msra.mxu0 %v662
    %705 = vmatprep.subr.mxu0 0.0
    %706 = vmatpush1.msra.mxu0 %v663
    %707 = vmatprep.subr.mxu0 0.0
    %708 = vmatpush1.msra.mxu0 %v664
    %709 = vmatprep.subr.mxu0 0.0
    %710 = vmatpush1.msra.mxu0 %v665
    %711 = vmatprep.subr.mxu0 0.0
    %712 = vmatpush1.msra.mxu0 %v666
    %713 = vmatprep.subr.mxu0 0.0
    %714 = vmatpush1.msra.mxu0 %v667
    %715 = vmatprep.subr.mxu0 0.0
    %716 = vmatpush1.msra.mxu0 %v668
    %717 = vmatprep.subr.mxu0 0.0
    %718 = vmatpush1.msra.mxu0 0.0
    %719 = vmatprep.subr.mxu0 0.0
    %720 = vmatpush1.msra.mxu0 0.0
    %721 = vmatprep.subr.mxu0 0.0
    %722 = vmatpush1.msra.mxu0 0.0
    %723 = vmatprep.subr.mxu0 0.0
    %724 = vmatpush1.msra.mxu0 0.0
    %725 = vmatprep.subr.mxu0 0.0
    %726 = vmatpush1.msra.mxu0 0.0
    %727 = vmatprep.subr.mxu0 0.0
    %728 = vmatpush1.msra.mxu0 0.0
    %729 = vmatprep.subr.mxu0 0.0
    %730 = vmatpush1.msra.mxu0 0.0
    %731 = vmatprep.subr.mxu0 0.0
    %732 = vmatpush1.msra.mxu0 0.0
    %733 = vmatprep.subr.mxu0 0.0
    %734 = vmatpush1.msra.mxu0 0.0
    %735 = vmatprep.subr.mxu0 0.0
    %736 = vmatpush1.msra.mxu0 0.0
    %737 = vmatprep.subr.mxu0 0.0
    %738 = vmatpush1.msra.mxu0 0.0
    %739 = vmatprep.subr.mxu0 0.0
    %740 = vmatpush1.msra.mxu0 0.0
    %741 = vmatprep.subr.mxu0 0.0
    %742 = vmatpush1.msra.mxu0 0.0
    %743 = vmatprep.subr.mxu0 0.0
    %744 = vmatpush1.msra.mxu0 0.0
    %745 = vmatprep.subr.mxu0 0.0
    %746 = vmatpush1.msra.mxu0 0.0
    %747 = vmatprep.subr.mxu0 0.0
    %748 = vmatpush1.msra.mxu0 0.0
    %749 = vmatprep.mubr.f32.mxu0 0.0
    %750 = vmatmul.mubr.f32.gmra.mrb[0].mxu0 %v652
    %v751 = vpop.f32.mrb[0].mxu0
    %v752 = vadd.f32 0.0, %v751
    %v753 = vpop.f32.mrb[0].mxu0
    %754 = vdwg.mxu0
    %v755 = vmul.f32 %v752, %v752
    %756 = vmatprep.subr.mxu0 0.0
    %757 = vmatpush1.msra.mxu0 %v669
    %758 = vmatprep.subr.mxu0 0.0
    %759 = vmatpush1.msra.mxu0 %v670
    %760 = vmatprep.subr.mxu0 0.0
    %761 = vmatpush1.msra.mxu0 %v671
    %762 = vmatprep.subr.mxu0 0.0
    %763 = vmatpush1.msra.mxu0 %v672
    %764 = vmatprep.subr.mxu0 0.0
    %765 = vmatpush1.msra.mxu0 %v673
    %766 = vmatprep.subr.mxu0 0.0
    %767 = vmatpush1.msra.mxu0 %v674
    %768 = vmatprep.subr.mxu0 0.0
    %769 = vmatpush1.msra.mxu0 %v675
    %770 = vmatprep.subr.mxu0 0.0
    %771 = vmatpush1.msra.mxu0 %v676
    %772 = vmatprep.subr.mxu0 0.0
    %773 = vmatpush1.msra.mxu0 %v677
    %774 = vmatprep.subr.mxu0 0.0
    %775 = vmatpush1.msra.mxu0 %v678
    %776 = vmatprep.subr.mxu0 0.0
    %777 = vmatpush1.msra.mxu0 %v679
    %778 = vmatprep.subr.mxu0 0.0
    %779 = vmatpush1.msra.mxu0 %v680
    %780 = vmatprep.subr.mxu0 0.0
    %781 = vmatpush1.msra.mxu0 %v681
    %782 = vmatprep.subr.mxu0 0.0
    %783 = vmatpush1.msra.mxu0 %v682
    %784 = vmatprep.subr.mxu0 0.0
    %785 = vmatpush1.msra.mxu0 %v683
    %786 = vmatprep.subr.mxu0 0.0
    %787 = vmatpush1.msra.mxu0 %v684
    %788 = vmatprep.subr.mxu0 0.0
    %789 = vmatpush1.msra.mxu0 0.0
    %790 = vmatprep.subr.mxu0 0.0
    %791 = vmatpush1.msra.mxu0 0.0
    %792 = vmatprep.subr.mxu0 0.0
    %793 = vmatpush1.msra.mxu0 0.0
    %794 = vmatprep.subr.mxu0 0.0
    %795 = vmatpush1.msra.mxu0 0.0
    %796 = vmatprep.subr.mxu0 0.0
    %797 = vmatpush1.msra.mxu0 0.0
    %798 = vmatprep.subr.mxu0 0.0
    %799 = vmatpush1.msra.mxu0 0.0
    %800 = vmatprep.subr.mxu0 0.0
    %801 = vmatpush1.msra.mxu0 0.0
    %802 = vmatprep.subr.mxu0 0.0
    %803 = vmatpush1.msra.mxu0 0.0
    %804 = vmatprep.subr.mxu0 0.0
    %805 = vmatpush1.msra.mxu0 0.0
    %806 = vmatprep.subr.mxu0 0.0
    %807 = vmatpush1.msra.mxu0 0.0
    %808 = vmatprep.subr.mxu0 0.0
    %809 = vmatpush1.msra.mxu0 0.0
    %810 = vmatprep.subr.mxu0 0.0
    %811 = vmatpush1.msra.mxu0 0.0
    %812 = vmatprep.subr.mxu0 0.0
    %813 = vmatpush1.msra.mxu0 0.0
    %814 = vmatprep.subr.mxu0 0.0
    %815 = vmatpush1.msra.mxu0 0.0
    %816 = vmatprep.subr.mxu0 0.0
    %817 = vmatpush1.msra.mxu0 0.0
    %818 = vmatprep.subr.mxu0 0.0
    %819 = vmatpush1.msra.mxu0 0.0
    %820 = vmatprep.mubr.f32.mxu0 0.0
    %821 = vmatmul.mubr.f32.gmra.mrb[0].mxu0 %v755
    %v822 = vpop.f32.mrb[0].mxu0
    %v823 = vadd.f32 0.0, %v822
    %v824 = vpop.f32.mrb[0].mxu0
    %825 = vdwg.mxu0
    %826 = vst [vmem:[%s5] sm:$0xff] %v823
    // Predicated region
    $region38: #{quantumnet_forward.1} parent=1 // pred_check
      _
    $region39: #{quantumnet_forward.1} parent=1 // pred_check_branch
      %828 = sbr.rel (0) target = $region41
    $region40: #{quantumnet_forward.1} parent=1 // pred_region
      _
    $region41: #{quantumnet_forward.1} parent=1 // pred_fallthru
      _
    // Predicated region
    $region42: #{quantumnet_forward.1} parent=1 // pred_check
      _
    $region43: #{quantumnet_forward.1} parent=1 // pred_check_branch
      %830 = sbr.rel (0) target = $region45
    $region44: #{quantumnet_forward.1} parent=1 // pred_region
      _
    $region45: #{quantumnet_forward.1} parent=1 // pred_fallthru
      _
    %831 = vsyncpa [#allocation3], 1
    %832 = vsyncpa [#allocation5], 1
    %833 = vsyncpa [#allocation8], 1

</llo_original>
